<compile_context>
chip_gen: v6e
topology: v6e:2x2x1
jax: 0.10.0
libtpu: 0.0.40
codegen_flags: <defaults>
</compile_context>

<pallas_src>
import functools

import jax
import jax.numpy as jnp
from jax.experimental import pallas as pl
from jax.experimental.pallas import tpu as pltpu


def _basic_block_kernel(taps, x_ref, w1_ref, w2_ref, bias_ref, mask_ref, out_ref):
    """Single grid step = the whole (batch-folded) BasicBlock.

    x_ref    : (B*C, H*W)     activations, (batch,channel) on sublanes, pixels on lanes
    w1_ref   : (B*C, 9*B*C)   conv1 block-diag im2col weights (BN1 scale folded)
    w2_ref   : (B*C, 9*B*C)   conv2 block-diag im2col weights (BN2 scale folded)
    bias_ref : (2, B*C, 1)    folded BN biases [b1, b2]
    mask_ref : (8, H*W)       zero-padding halo masks for the 8 non-center taps
    out_ref  : (B*C, H*W)
    """
    x = x_ref[...]                                      # (BC, HW) f32

    def im2col(a):
        """Stack the 9 shifted+masked tap copies into one (9*BC, HW) patch matrix."""
        pieces = []
        for shift, mi in taps:                          # static Python loop (9 taps)
            if mi is None:
                pieces.append(a)                        # center tap: no shift, no mask
            else:
                s = pltpu.roll(a, shift=shift, axis=1)  # XLU lane rotate (free slot)
                s = s * mask_ref[pl.ds(mi, 1), :]       # precomputed (1, HW) halo mask
                pieces.append(s)
        return jnp.concatenate(pieces, axis=0)          # (9*BC, HW)

    # conv1 -> bn1 (scale folded into w1, bias here) -> relu : ONE fused matmul.
    out1 = jnp.dot(w1_ref[...], im2col(x), preferred_element_type=jnp.float32)
    out1 = jnp.maximum(out1 + bias_ref[0], 0.0)

    # conv2 -> bn2 -> + identity residual -> relu : ONE fused matmul.
    out2 = jnp.dot(w2_ref[...], im2col(out1), preferred_element_type=jnp.float32)
    out2 = out2 + bias_ref[1] + x
    out_ref[...] = jnp.maximum(out2, 0.0)


def basic_block_pallas(x_nchw, w1_oihw, w2_oihw, bn1, bn2, eps=1e-5):
    """x_nchw: (B, C, H, W) -> (B, C, H, W). Eval-mode BN, identity residual."""
    g1, be1, m1, v1 = bn1
    g2, be2, m2, v2 = bn2
    # Fold BN (inference mode) into per-output-channel scale/bias.
    s1 = g1 / jnp.sqrt(v1 + eps)
    b1 = be1 - m1 * s1
    s2 = g2 / jnp.sqrt(v2 + eps)
    b2 = be2 - m2 * s2

    B, Cin, H, W = x_nchw.shape
    C = w1_oihw.shape[0]
    assert Cin == C, "identity residual requires inplanes == planes, stride == 1"
    HW = H * W
    BC = B * C

    # Batch folded onto sublanes, pixels flattened onto lanes (free reshape).
    x = x_nchw.reshape(BC, HW).astype(jnp.float32)

    def block_diag_im2col_weights(w_oihw, scale):
        """(C,C,3,3) OIHW + BN scale -> (B*C, 9*B*C) block-diagonal im2col weights.

        Patch-matrix row ordering (must match the kernel's concat): (t, b, ci)
        with t = kh*3 + kw.  Output row ordering: (b, co).
        """
        wf = (w_oihw * scale[:, None, None, None]).astype(jnp.float32)
        w_tap = jnp.transpose(wf, (2, 3, 0, 1)).reshape(9, C, C)     # (t, co, ci)
        w_ctc = jnp.transpose(w_tap, (1, 0, 2))                      # (co, t, ci)
        wbd = jnp.zeros((B, C, 9, B, C), jnp.float32)
        for b in range(B):                                           # B is tiny/static
            wbd = wbd.at[b, :, :, b, :].set(w_ctc)
        return wbd.reshape(BC, 9 * BC)
        # At real widths on v6e/v7x: .astype(jnp.bfloat16) here (and cast the
        # patch matrix in-kernel) — halves MXU passes; loosen the test tol.

    w1k = block_diag_im2col_weights(w1_oihw, s1)
    w2k = block_diag_im2col_weights(w2_oihw, s2)

    # Single consolidated bias side-input, per flattened (b, co) row.
    bias = jnp.stack([jnp.tile(b1, B), jnp.tile(b2, B)], axis=0)
    bias = bias.astype(jnp.float32).reshape(2, BC, 1)

    # Precompute halo masks (wrapper-side, shipped once as a resident input)
    # and the static (lane-shift, mask-row) tap table baked into the kernel.
    lane = jnp.arange(HW)
    row, col = lane // W, lane % W
    mask_rows, taps = [], []
    mi = 0
    for kh in range(3):
        for kw in range(3):
            dh, dw = kh - 1, kw - 1
            if dh == 0 and dw == 0:
                taps.append((0, None))                   # center tap
                continue
            shift = (-(dh * W + dw)) % HW                # out[p] = in[p + dh*W + dw]
            valid = ((row + dh >= 0) & (row + dh < H) &
                     (col + dw >= 0) & (col + dw < W)).astype(jnp.float32)
            mask_rows.append(valid)
            taps.append((shift, mi))
            mi += 1
    masks = jnp.stack(mask_rows, axis=0)                 # (8, HW)

    kernel = functools.partial(_basic_block_kernel, tuple(taps))

    out = pl.pallas_call(
        kernel,
        out_shape=jax.ShapeDtypeStruct((BC, HW), jnp.float32),
        grid_spec=pltpu.PrefetchScalarGridSpec(
            num_scalar_prefetch=0,
            grid=(1,),                                   # single step: no per-step overhead
            in_specs=[
                pl.BlockSpec((BC, HW), lambda i: (0, 0)),        # x (lane-dense)
                pl.BlockSpec((BC, 9 * BC), lambda i: (0, 0)),    # w1 (lane-dense, resident)
                pl.BlockSpec((BC, 9 * BC), lambda i: (0, 0)),    # w2 (lane-dense, resident)
                pl.BlockSpec((2, BC, 1), lambda i: (0, 0, 0)),   # folded BN biases
                pl.BlockSpec((8, HW), lambda i: (0, 0)),         # halo masks (resident)
            ],
            out_specs=pl.BlockSpec((BC, HW), lambda i: (0, 0)),
        ),
        compiler_params=pltpu.CompilerParams(
            dimension_semantics=("arbitrary",)),
    )(x, w1k, w2k, bias, masks)

    return out.reshape(B, C, H, W)


def basic_block_reference(x, w1, w2, bn1, bn2, eps=1e-5):
    """Pure-JAX reference matching PyTorch BasicBlock (eval-mode BN)."""
    def conv(a, w):
        return jax.lax.conv_general_dilated(
            a, w, window_strides=(1, 1), padding=((1, 1), (1, 1)),
            dimension_numbers=("NCHW", "OIHW", "NCHW"))

    def bn(a, params):
        g, b, m, v = params
        return (g[None, :, None, None] * (a - m[None, :, None, None])
                / jnp.sqrt(v[None, :, None, None] + eps)
                + b[None, :, None, None])

    out = jnp.maximum(bn(conv(x, w1), bn1), 0.0)
    out = bn(conv(out, w2), bn2) + x
    return jnp.maximum(out, 0.0)


if __name__ == "__main__":
    B, C, H, W = 2, 4, 16, 16   # inplanes = planes = 4, stride = 1
    key = jax.random.PRNGKey(0)
    k = jax.random.split(key, 9)

    x = jax.random.normal(k[0], (B, C, H, W), jnp.float32)
    w1 = jax.random.normal(k[1], (C, C, 3, 3), jnp.float32) * 0.1   # OIHW
    w2 = jax.random.normal(k[2], (C, C, 3, 3), jnp.float32) * 0.1   # OIHW
    bn1 = (1.0 + 0.1 * jax.random.normal(k[3], (C,), jnp.float32),  # gamma
           0.1 * jax.random.normal(k[4], (C,), jnp.float32),        # beta
           0.1 * jax.random.normal(k[5], (C,), jnp.float32),        # running_mean
           1.0 + 0.1 * jax.random.uniform(k[6], (C,), jnp.float32)) # running_var
    bn2 = (1.0 + 0.1 * jax.random.normal(k[7], (C,), jnp.float32),
           0.1 * jax.random.normal(k[8], (C,), jnp.float32),
           jnp.zeros((C,), jnp.float32),
           jnp.ones((C,), jnp.float32))

    out = basic_block_pallas(x, w1, w2, bn1, bn2)
    out = jax.block_until_ready(out)

    ref = basic_block_reference(x, w1, w2, bn1, bn2)
    assert out.shape == (B, C, H, W)
    assert jnp.allclose(out, ref, rtol=1e-4, atol=1e-4), float(
        jnp.max(jnp.abs(out - ref)))

    print("KERNEL_OK")
</pallas_src>

<mosaic_0001>
module attributes {stable_mosaic.version = 11 : i64} {
  func.func @_basic_block_kernel(%arg0: i32, %arg1: memref<8x256xf32, #tpu.memory_space<vmem>>, %arg2: memref<8x72xf32, #tpu.memory_space<vmem>>, %arg3: memref<8x72xf32, #tpu.memory_space<vmem>>, %arg4: memref<2x8x1xf32, #tpu.memory_space<vmem>>, %arg5: memref<8x256xf32, #tpu.memory_space<vmem>>, %arg6: memref<8x256xf32, #tpu.memory_space<vmem>>) attributes {dimension_semantics = [#tpu.dimension_semantics<arbitrary>], iteration_bounds = array<i64: 1>, scalar_prefetch = 0 : i64, scratch_operands = 0 : i64, tpu.core_type = #tpu.core_type<tc>, window_params = [{pipeline_mode = #tpu.pipeline_mode<synchronous>, transform_indices = @transform_0, window_bounds = array<i64: 8, 256>}, {pipeline_mode = #tpu.pipeline_mode<synchronous>, transform_indices = @transform_1, window_bounds = array<i64: 8, 72>}, {pipeline_mode = #tpu.pipeline_mode<synchronous>, transform_indices = @transform_2, window_bounds = array<i64: 8, 72>}, {pipeline_mode = #tpu.pipeline_mode<synchronous>, transform_indices = @transform_3, window_bounds = array<i64: 2, 8, 1>}, {pipeline_mode = #tpu.pipeline_mode<synchronous>, transform_indices = @transform_4, window_bounds = array<i64: 8, 256>}, {pipeline_mode = #tpu.pipeline_mode<synchronous>, transform_indices = @transform_5, window_bounds = array<i64: 8, 256>}]} {
    %c0 = arith.constant 0 : index
    %c0_0 = arith.constant 0 : index
    %0 = vector.load %arg1[%c0, %c0_0] : memref<8x256xf32, #tpu.memory_space<vmem>>, vector<8x256xf32>
    %c0_1 = arith.constant 0 : index
    %c0_2 = arith.constant 0 : index
    %1 = vector.load %arg2[%c0_1, %c0_2] : memref<8x72xf32, #tpu.memory_space<vmem>>, vector<8x72xf32>
    %c17_i32 = arith.constant 17 : i32
    %2 = tpu.dynamic_rotate %0 by %c17_i32 dim 1 : vector<8x256xf32>, i32 -> vector<8x256xf32>
    %c0_3 = arith.constant 0 : index
    %c0_4 = arith.constant 0 : index
    %3 = vector.load %arg5[%c0_3, %c0_4] : memref<8x256xf32, #tpu.memory_space<vmem>>, vector<1x256xf32>
    %4 = vector.broadcast %3 : vector<1x256xf32> to vector<8x256xf32>
    %5 = arith.mulf %2, %4 : vector<8x256xf32>
    %c16_i32 = arith.constant 16 : i32
    %6 = tpu.dynamic_rotate %0 by %c16_i32 dim 1 : vector<8x256xf32>, i32 -> vector<8x256xf32>
    %c1 = arith.constant 1 : index
    %c0_5 = arith.constant 0 : index
    %7 = vector.load %arg5[%c1, %c0_5] : memref<8x256xf32, #tpu.memory_space<vmem>>, vector<1x256xf32>
    %8 = vector.broadcast %7 : vector<1x256xf32> to vector<8x256xf32>
    %9 = arith.mulf %6, %8 : vector<8x256xf32>
    %c15_i32 = arith.constant 15 : i32
    %10 = tpu.dynamic_rotate %0 by %c15_i32 dim 1 : vector<8x256xf32>, i32 -> vector<8x256xf32>
    %c2 = arith.constant 2 : index
    %c0_6 = arith.constant 0 : index
    %11 = vector.load %arg5[%c2, %c0_6] : memref<8x256xf32, #tpu.memory_space<vmem>>, vector<1x256xf32>
    %12 = vector.broadcast %11 : vector<1x256xf32> to vector<8x256xf32>
    %13 = arith.mulf %10, %12 : vector<8x256xf32>
    %c1_i32 = arith.constant 1 : i32
    %14 = tpu.dynamic_rotate %0 by %c1_i32 dim 1 : vector<8x256xf32>, i32 -> vector<8x256xf32>
    %c3 = arith.constant 3 : index
    %c0_7 = arith.constant 0 : index
    %15 = vector.load %arg5[%c3, %c0_7] : memref<8x256xf32, #tpu.memory_space<vmem>>, vector<1x256xf32>
    %16 = vector.broadcast %15 : vector<1x256xf32> to vector<8x256xf32>
    %17 = arith.mulf %14, %16 : vector<8x256xf32>
    %c255_i32 = arith.constant 255 : i32
    %18 = tpu.dynamic_rotate %0 by %c255_i32 dim 1 : vector<8x256xf32>, i32 -> vector<8x256xf32>
    %c4 = arith.constant 4 : index
    %c0_8 = arith.constant 0 : index
    %19 = vector.load %arg5[%c4, %c0_8] : memref<8x256xf32, #tpu.memory_space<vmem>>, vector<1x256xf32>
    %20 = vector.broadcast %19 : vector<1x256xf32> to vector<8x256xf32>
    %21 = arith.mulf %18, %20 : vector<8x256xf32>
    %c241_i32 = arith.constant 241 : i32
    %22 = tpu.dynamic_rotate %0 by %c241_i32 dim 1 : vector<8x256xf32>, i32 -> vector<8x256xf32>
    %c5 = arith.constant 5 : index
    %c0_9 = arith.constant 0 : index
    %23 = vector.load %arg5[%c5, %c0_9] : memref<8x256xf32, #tpu.memory_space<vmem>>, vector<1x256xf32>
    %24 = vector.broadcast %23 : vector<1x256xf32> to vector<8x256xf32>
    %25 = arith.mulf %22, %24 : vector<8x256xf32>
    %c240_i32 = arith.constant 240 : i32
    %26 = tpu.dynamic_rotate %0 by %c240_i32 dim 1 : vector<8x256xf32>, i32 -> vector<8x256xf32>
    %c6 = arith.constant 6 : index
    %c0_10 = arith.constant 0 : index
    %27 = vector.load %arg5[%c6, %c0_10] : memref<8x256xf32, #tpu.memory_space<vmem>>, vector<1x256xf32>
    %28 = vector.broadcast %27 : vector<1x256xf32> to vector<8x256xf32>
    %29 = arith.mulf %26, %28 : vector<8x256xf32>
    %c239_i32 = arith.constant 239 : i32
    %30 = tpu.dynamic_rotate %0 by %c239_i32 dim 1 : vector<8x256xf32>, i32 -> vector<8x256xf32>
    %c7 = arith.constant 7 : index
    %c0_11 = arith.constant 0 : index
    %31 = vector.load %arg5[%c7, %c0_11] : memref<8x256xf32, #tpu.memory_space<vmem>>, vector<1x256xf32>
    %32 = vector.broadcast %31 : vector<1x256xf32> to vector<8x256xf32>
    %33 = arith.mulf %30, %32 : vector<8x256xf32>
    %34 = tpu.concatenate %5, %9, %13, %17, %0, %21, %25, %29, %33 in 0 : vector<8x256xf32>, vector<8x256xf32>, vector<8x256xf32>, vector<8x256xf32>, vector<8x256xf32>, vector<8x256xf32>, vector<8x256xf32>, vector<8x256xf32>, vector<8x256xf32> -> vector<72x256xf32>
    %cst = arith.constant dense<0.000000e+00> : vector<8x256xf32>
    %35 = tpu.matmul %1, %34, %cst {dimension_numbers = #tpu.dot_dimension_numbers<[1], [0], [0], [1], [0, 0, 1, 1], [], []>} : vector<8x72xf32>, vector<72x256xf32>, vector<8x256xf32> -> vector<8x256xf32>
    %c0_12 = arith.constant 0 : index
    %c0_13 = arith.constant 0 : index
    %c0_14 = arith.constant 0 : index
    %36 = vector.load %arg4[%c0_12, %c0_13, %c0_14] : memref<2x8x1xf32, #tpu.memory_space<vmem>>, vector<1x8x1xf32>
    %37 = vector.shape_cast %36 : vector<1x8x1xf32> to vector<8x1xf32>
    %38 = vector.broadcast %37 : vector<8x1xf32> to vector<8x256xf32>
    %39 = arith.addf %35, %38 : vector<8x256xf32>
    %cst_15 = arith.constant 0.000000e+00 : f32
    %40 = vector.broadcast %cst_15 : f32 to vector<8x256xf32>
    %41 = arith.maximumf %39, %40 : vector<8x256xf32>
    %c0_16 = arith.constant 0 : index
    %c0_17 = arith.constant 0 : index
    %42 = vector.load %arg3[%c0_16, %c0_17] : memref<8x72xf32, #tpu.memory_space<vmem>>, vector<8x72xf32>
    %c17_i32_18 = arith.constant 17 : i32
    %43 = tpu.dynamic_rotate %41 by %c17_i32_18 dim 1 : vector<8x256xf32>, i32 -> vector<8x256xf32>
    %c0_19 = arith.constant 0 : index
    %c0_20 = arith.constant 0 : index
    %44 = vector.load %arg5[%c0_19, %c0_20] : memref<8x256xf32, #tpu.memory_space<vmem>>, vector<1x256xf32>
    %45 = vector.broadcast %44 : vector<1x256xf32> to vector<8x256xf32>
    %46 = arith.mulf %43, %45 : vector<8x256xf32>
    %c16_i32_21 = arith.constant 16 : i32
    %47 = tpu.dynamic_rotate %41 by %c16_i32_21 dim 1 : vector<8x256xf32>, i32 -> vector<8x256xf32>
    %c1_22 = arith.constant 1 : index
    %c0_23 = arith.constant 0 : index
    %48 = vector.load %arg5[%c1_22, %c0_23] : memref<8x256xf32, #tpu.memory_space<vmem>>, vector<1x256xf32>
    %49 = vector.broadcast %48 : vector<1x256xf32> to vector<8x256xf32>
    %50 = arith.mulf %47, %49 : vector<8x256xf32>
    %c15_i32_24 = arith.constant 15 : i32
    %51 = tpu.dynamic_rotate %41 by %c15_i32_24 dim 1 : vector<8x256xf32>, i32 -> vector<8x256xf32>
    %c2_25 = arith.constant 2 : index
    %c0_26 = arith.constant 0 : index
    %52 = vector.load %arg5[%c2_25, %c0_26] : memref<8x256xf32, #tpu.memory_space<vmem>>, vector<1x256xf32>
    %53 = vector.broadcast %52 : vector<1x256xf32> to vector<8x256xf32>
    %54 = arith.mulf %51, %53 : vector<8x256xf32>
    %c1_i32_27 = arith.constant 1 : i32
    %55 = tpu.dynamic_rotate %41 by %c1_i32_27 dim 1 : vector<8x256xf32>, i32 -> vector<8x256xf32>
    %c3_28 = arith.constant 3 : index
    %c0_29 = arith.constant 0 : index
    %56 = vector.load %arg5[%c3_28, %c0_29] : memref<8x256xf32, #tpu.memory_space<vmem>>, vector<1x256xf32>
    %57 = vector.broadcast %56 : vector<1x256xf32> to vector<8x256xf32>
    %58 = arith.mulf %55, %57 : vector<8x256xf32>
    %c255_i32_30 = arith.constant 255 : i32
    %59 = tpu.dynamic_rotate %41 by %c255_i32_30 dim 1 : vector<8x256xf32>, i32 -> vector<8x256xf32>
    %c4_31 = arith.constant 4 : index
    %c0_32 = arith.constant 0 : index
    %60 = vector.load %arg5[%c4_31, %c0_32] : memref<8x256xf32, #tpu.memory_space<vmem>>, vector<1x256xf32>
    %61 = vector.broadcast %60 : vector<1x256xf32> to vector<8x256xf32>
    %62 = arith.mulf %59, %61 : vector<8x256xf32>
    %c241_i32_33 = arith.constant 241 : i32
    %63 = tpu.dynamic_rotate %41 by %c241_i32_33 dim 1 : vector<8x256xf32>, i32 -> vector<8x256xf32>
    %c5_34 = arith.constant 5 : index
    %c0_35 = arith.constant 0 : index
    %64 = vector.load %arg5[%c5_34, %c0_35] : memref<8x256xf32, #tpu.memory_space<vmem>>, vector<1x256xf32>
    %65 = vector.broadcast %64 : vector<1x256xf32> to vector<8x256xf32>
    %66 = arith.mulf %63, %65 : vector<8x256xf32>
    %c240_i32_36 = arith.constant 240 : i32
    %67 = tpu.dynamic_rotate %41 by %c240_i32_36 dim 1 : vector<8x256xf32>, i32 -> vector<8x256xf32>
    %c6_37 = arith.constant 6 : index
    %c0_38 = arith.constant 0 : index
    %68 = vector.load %arg5[%c6_37, %c0_38] : memref<8x256xf32, #tpu.memory_space<vmem>>, vector<1x256xf32>
    %69 = vector.broadcast %68 : vector<1x256xf32> to vector<8x256xf32>
    %70 = arith.mulf %67, %69 : vector<8x256xf32>
    %c239_i32_39 = arith.constant 239 : i32
    %71 = tpu.dynamic_rotate %41 by %c239_i32_39 dim 1 : vector<8x256xf32>, i32 -> vector<8x256xf32>
    %c7_40 = arith.constant 7 : index
    %c0_41 = arith.constant 0 : index
    %72 = vector.load %arg5[%c7_40, %c0_41] : memref<8x256xf32, #tpu.memory_space<vmem>>, vector<1x256xf32>
    %73 = vector.broadcast %72 : vector<1x256xf32> to vector<8x256xf32>
    %74 = arith.mulf %71, %73 : vector<8x256xf32>
    %75 = tpu.concatenate %46, %50, %54, %58, %41, %62, %66, %70, %74 in 0 : vector<8x256xf32>, vector<8x256xf32>, vector<8x256xf32>, vector<8x256xf32>, vector<8x256xf32>, vector<8x256xf32>, vector<8x256xf32>, vector<8x256xf32>, vector<8x256xf32> -> vector<72x256xf32>
    %cst_42 = arith.constant dense<0.000000e+00> : vector<8x256xf32>
    %76 = tpu.matmul %42, %75, %cst_42 {dimension_numbers = #tpu.dot_dimension_numbers<[1], [0], [0], [1], [0, 0, 1, 1], [], []>} : vector<8x72xf32>, vector<72x256xf32>, vector<8x256xf32> -> vector<8x256xf32>
    %c1_43 = arith.constant 1 : index
    %c0_44 = arith.constant 0 : index
    %c0_45 = arith.constant 0 : index
    %77 = vector.load %arg4[%c1_43, %c0_44, %c0_45] : memref<2x8x1xf32, #tpu.memory_space<vmem>>, vector<1x8x1xf32>
    %78 = vector.shape_cast %77 : vector<1x8x1xf32> to vector<8x1xf32>
    %79 = vector.broadcast %78 : vector<8x1xf32> to vector<8x256xf32>
    %80 = arith.addf %76, %79 : vector<8x256xf32>
    %81 = arith.addf %80, %0 : vector<8x256xf32>
    %cst_46 = arith.constant 0.000000e+00 : f32
    %82 = vector.broadcast %cst_46 : f32 to vector<8x256xf32>
    %83 = arith.maximumf %81, %82 : vector<8x256xf32>
    %c0_47 = arith.constant 0 : index
    %c0_48 = arith.constant 0 : index
    %84 = vector.load %arg6[%c0_47, %c0_48] : memref<8x256xf32, #tpu.memory_space<vmem>>, vector<8x256xf32>
    tpu.vector_store %arg6[%c0_47, %c0_48], %83 {strides = array<i32>} : memref<8x256xf32, #tpu.memory_space<vmem>>, vector<8x256xf32>,
    return
  }
  func.func @transform_0(%arg0: i32) -> (i32, i32) {
    %c0_i32 = arith.constant 0 : i32
    %c0_i32_0 = arith.constant 0 : i32
    %c0_i32_1 = arith.constant 0 : i32
    return %c0_i32, %c0_i32_0 : i32, i32
  }
  func.func @transform_1(%arg0: i32) -> (i32, i32) {
    %c0_i32 = arith.constant 0 : i32
    %c0_i32_0 = arith.constant 0 : i32
    %c0_i32_1 = arith.constant 0 : i32
    return %c0_i32, %c0_i32_0 : i32, i32
  }
  func.func @transform_2(%arg0: i32) -> (i32, i32) {
    %c0_i32 = arith.constant 0 : i32
    %c0_i32_0 = arith.constant 0 : i32
    %c0_i32_1 = arith.constant 0 : i32
    return %c0_i32, %c0_i32_0 : i32, i32
  }
  func.func @transform_3(%arg0: i32) -> (i32, i32, i32) {
    %c0_i32 = arith.constant 0 : i32
    %c0_i32_0 = arith.constant 0 : i32
    %c0_i32_1 = arith.constant 0 : i32
    %c0_i32_2 = arith.constant 0 : i32
    return %c0_i32, %c0_i32_0, %c0_i32_1 : i32, i32, i32
  }
  func.func @transform_4(%arg0: i32) -> (i32, i32) {
    %c0_i32 = arith.constant 0 : i32
    %c0_i32_0 = arith.constant 0 : i32
    %c0_i32_1 = arith.constant 0 : i32
    return %c0_i32, %c0_i32_0 : i32, i32
  }
  func.func @transform_5(%arg0: i32) -> (i32, i32) {
    %c0_i32 = arith.constant 0 : i32
    %c0_i32_0 = arith.constant 0 : i32
    %c0_i32_1 = arith.constant 0 : i32
    return %c0_i32, %c0_i32_0 : i32, i32
  }
}

</mosaic_0001>

<llo_original>
// kernel: tpu_custom_call.1
$region0: #{tpu_custom_call.1}
  #allocation0 [shape = 'u32[]', space=smem, size = 0x4, offset = 0x4, fixed_abs, tag = 'smem constant byte address 0x4 - core index']
  #allocation1 [shape = 'u32[144,128]{1,0:T(1,128)}', space=vmem, size = 0x12000, scoped, tag = 'internal scratch']
  %s0 = inlined_call_operand.vmem [shape: f32[8,256], index: 0, kind: input, shape index: {}]
  %s1 = inlined_call_operand.hbm [shape: f32[8,72], index: 1, kind: input, shape index: {}]
  %s2 = inlined_call_operand.hbm [shape: f32[8,72], index: 2, kind: input, shape index: {}]
  %s3 = inlined_call_operand.vmem [shape: f32[2,8,1], index: 3, kind: input, shape index: {}]
  %s4 = inlined_call_operand.hbm [shape: f32[8,256], index: 4, kind: input, shape index: {}]
  %s5 = inlined_call_operand.hbm [shape: f32[8,256], index: 5, kind: output, shape index: {}]
  %s6 = sld [smem:[#allocation0]]
  $region42: #{tpu_custom_call.1} parent=0
    _
  %s8 = ssub.s32 1, %s6
  %s9 = scalar_select 0, %s8, %s6
  $region1: #{tpu_custom_call.1} parent=0
    #allocation2 [shape = 'u8[4096]{0}', space=vmem, size = 0x1000, scoped, tag = 'input window, operand 1, single buffered']
    #allocation3 [shape = 's32[1]{0}', space=sflag, size = 0x4, scoped, tag = 'scoped memory for tpu_custom_call.1']
    #allocation4 [shape = 's32[1]{0}', space=sflag, size = 0x4, scoped, tag = 'scoped memory for tpu_custom_call.1']
    #allocation5 [shape = 'u8[4096]{0}', space=vmem, size = 0x1000, scoped, tag = 'input window, operand 2, single buffered']
    #allocation6 [shape = 's32[1]{0}', space=sflag, size = 0x4, scoped, tag = 'scoped memory for tpu_custom_call.1']
    #allocation7 [shape = 'u8[8192]{0}', space=vmem, size = 0x2000, scoped, tag = 'input window, operand 4, single buffered']
    #allocation8 [shape = 'u8[8192]{0}', space=vmem, size = 0x2000, scoped, tag = 'output window, operand 0, single buffered']
    %10 = vsyncpa [#allocation3], 0
    %11 = vsyncpa [#allocation6], 0
    %12 = vsyncpa [#allocation4], 0
    // Predicated region
    $region2: #{tpu_custom_call.1} parent=1 // pred_check
      _
    $region3: #{tpu_custom_call.1} parent=1 // pred_check_branch
      %14 = sbr.rel (0) target = $region5
    $region4: #{tpu_custom_call.1} parent=1 // pred_region
      _
    $region5: #{tpu_custom_call.1} parent=1 // pred_fallthru
      _
    // Predicated region
    $region6: #{tpu_custom_call.1} parent=1 // pred_check
      _
    $region7: #{tpu_custom_call.1} parent=1 // pred_check_branch
      %16 = sbr.rel (0) target = $region9
    $region8: #{tpu_custom_call.1} parent=1 // pred_region
      %s18 = ssub.s32 128, 128
      %19 = vsyncadd [#allocation3], %s18
      %s21 = sshll.u32 [#allocation2], 4
      %s22 = int_to_ptr.vmem [resolvable:$true] %s21
      %24 = dma.hbm_to_vmem [thread:$0]  %s1, 128, %s22, [#allocation3]
    $region9: #{tpu_custom_call.1} parent=1 // pred_fallthru
      _
    // Predicated region
    $region10: #{tpu_custom_call.1} parent=1 // pred_check
      _
    $region11: #{tpu_custom_call.1} parent=1 // pred_check_branch
      %26 = sbr.rel (0) target = $region13
    $region12: #{tpu_custom_call.1} parent=1 // pred_region
      %s28 = ssub.s32 128, 128
      %29 = vsyncadd [#allocation6], %s28
      %s31 = sshll.u32 [#allocation5], 4
      %s32 = int_to_ptr.vmem [resolvable:$true] %s31
      %34 = dma.hbm_to_vmem [thread:$0]  %s2, 128, %s32, [#allocation6]
    $region13: #{tpu_custom_call.1} parent=1 // pred_fallthru
      _
    // Predicated region
    $region14: #{tpu_custom_call.1} parent=1 // pred_check
      _
    $region15: #{tpu_custom_call.1} parent=1 // pred_check_branch
      %36 = sbr.rel (0) target = $region17
    $region16: #{tpu_custom_call.1} parent=1 // pred_region
      _
    $region17: #{tpu_custom_call.1} parent=1 // pred_fallthru
      _
    // Predicated region
    $region18: #{tpu_custom_call.1} parent=1 // pred_check
      _
    $region19: #{tpu_custom_call.1} parent=1 // pred_check_branch
      %38 = sbr.rel (0) target = $region21
    $region20: #{tpu_custom_call.1} parent=1 // pred_region
      %s40 = ssub.s32 256, 256
      %41 = vsyncadd [#allocation6], %s40
      %s43 = sshll.u32 [#allocation7], 4
      %s44 = int_to_ptr.vmem [resolvable:$true] %s43
      %46 = dma.hbm_to_vmem [thread:$0]  %s4, 256, %s44, [#allocation6]
    $region21: #{tpu_custom_call.1} parent=1 // pred_fallthru
      _
    // Predicated region
    $region22: #{tpu_custom_call.1} parent=1 // pred_check
      _
    $region23: #{tpu_custom_call.1} parent=1 // pred_check_branch
      %48 = sbr.rel (0) target = $region25
    $region24: #{tpu_custom_call.1} parent=1 // pred_region
      %49 = dma.done [#allocation3], 128
    $region25: #{tpu_custom_call.1} parent=1 // pred_fallthru
      _
    // Predicated region
    $region26: #{tpu_custom_call.1} parent=1 // pred_check
      _
    $region27: #{tpu_custom_call.1} parent=1 // pred_check_branch
      %51 = sbr.rel (0) target = $region29
    $region28: #{tpu_custom_call.1} parent=1 // pred_region
      %52 = dma.done [#allocation6], 128
    $region29: #{tpu_custom_call.1} parent=1 // pred_fallthru
      _
    // Predicated region
    $region30: #{tpu_custom_call.1} parent=1 // pred_check
      _
    $region31: #{tpu_custom_call.1} parent=1 // pred_check_branch
      %54 = sbr.rel (0) target = $region33
    $region32: #{tpu_custom_call.1} parent=1 // pred_region
      %55 = dma.done [#allocation6], 256
    $region33: #{tpu_custom_call.1} parent=1 // pred_fallthru
      _
    %v56 = vld [vmem:[%s0] sm:$0xff]
    %v57 = vld [vmem:[%s0 + $0x8] sm:$0xff]
    %v58 = vld [vmem:[#allocation2] sm:$0xff]
    %59 = vrot.lane.b32.xlu0 %v56, 17
    %v60 = vpop.permute.xlu0 %59
    %61 = vrot.lane.b32.xlu0 %v57, 17
    %v62 = vpop.permute.xlu0 %61
    %v63 = vlaneseq
    %v64 = vand.u32 %v63, 127
    %vm65 = vcmp.lt.s32.totalorder %v64, 17
    %v66 = vsel %vm65, %v60, %v62
    %v67 = vsel %vm65, %v62, %v60
    %v68 = vld [vmem:[#allocation7] ss:$8 sm:$0x3]
    %v70 = vlaneseq
    %v71 = vshrl.u32 %v70, 7
    %v72 = vsub.s32 0, %v71
    %v73 = vrot.slane %v68, %v72
    %v74 = vlaneseq
    %v75 = vshrl.u32 %v74, 7
    %v76 = vsub.s32 1, %v75
    %v77 = vrot.slane %v68, %v76
    %v80 = vmul.f32 %v67, %v73
    %v81 = vmul.f32 %v66, %v77
    %82 = vrot.lane.b32.xlu0 %v56, 16
    %v83 = vpop.permute.xlu0 %82
    %84 = vrot.lane.b32.xlu0 %v57, 16
    %v85 = vpop.permute.xlu0 %84
    %vm86 = vcmp.lt.s32.totalorder %v64, 16
    %v87 = vsel %vm86, %v83, %v85
    %v88 = vsel %vm86, %v85, %v83
    %s89 = scalar_lea.vmem [#allocation7], 1
    %v90 = vld [vmem:[%s89] ss:$8 sm:$0x3]
    %v92 = vlaneseq
    %v93 = vshrl.u32 %v92, 7
    %v94 = vsub.s32 0, %v93
    %v95 = vrot.slane %v90, %v94
    %v96 = vlaneseq
    %v97 = vshrl.u32 %v96, 7
    %v98 = vsub.s32 1, %v97
    %v99 = vrot.slane %v90, %v98
    %v102 = vmul.f32 %v88, %v95
    %v103 = vmul.f32 %v87, %v99
    %104 = vrot.lane.b32.xlu0 %v56, 15
    %v105 = vpop.permute.xlu0 %104
    %106 = vrot.lane.b32.xlu0 %v57, 15
    %v107 = vpop.permute.xlu0 %106
    %vm108 = vcmp.lt.s32.totalorder %v64, 15
    %v109 = vsel %vm108, %v105, %v107
    %v110 = vsel %vm108, %v107, %v105
    %s111 = scalar_lea.vmem [#allocation7], 2
    %v112 = vld [vmem:[%s111] ss:$8 sm:$0x3]
    %v114 = vlaneseq
    %v115 = vshrl.u32 %v114, 7
    %v116 = vsub.s32 0, %v115
    %v117 = vrot.slane %v112, %v116
    %v118 = vlaneseq
    %v119 = vshrl.u32 %v118, 7
    %v120 = vsub.s32 1, %v119
    %v121 = vrot.slane %v112, %v120
    %v124 = vmul.f32 %v110, %v117
    %v125 = vmul.f32 %v109, %v121
    %126 = vrot.lane.b32.xlu0 %v56, 1
    %v127 = vpop.permute.xlu0 %126
    %128 = vrot.lane.b32.xlu0 %v57, 1
    %v129 = vpop.permute.xlu0 %128
    %vm130 = vcmp.lt.s32.totalorder %v64, 1
    %v131 = vsel %vm130, %v127, %v129
    %v132 = vsel %vm130, %v129, %v127
    %s133 = scalar_lea.vmem [#allocation7], 3
    %v134 = vld [vmem:[%s133] ss:$8 sm:$0x3]
    %v136 = vlaneseq
    %v137 = vshrl.u32 %v136, 7
    %v138 = vsub.s32 0, %v137
    %v139 = vrot.slane %v134, %v138
    %v140 = vlaneseq
    %v141 = vshrl.u32 %v140, 7
    %v142 = vsub.s32 1, %v141
    %v143 = vrot.slane %v134, %v142
    %v146 = vmul.f32 %v132, %v139
    %v147 = vmul.f32 %v131, %v143
    %148 = vrot.lane.b32.xlu0 %v56, 127
    %v149 = vpop.permute.xlu0 %148
    %150 = vrot.lane.b32.xlu0 %v57, 127
    %v151 = vpop.permute.xlu0 %150
    %vm152 = vcmp.lt.s32.totalorder %v64, 127
    %v153 = vsel %vm152, %v149, %v151
    %v154 = vsel %vm152, %v151, %v149
    %s155 = scalar_lea.vmem [#allocation7], 4
    %v156 = vld [vmem:[%s155] ss:$8 sm:$0x3]
    %v158 = vlaneseq
    %v159 = vshrl.u32 %v158, 7
    %v160 = vsub.s32 0, %v159
    %v161 = vrot.slane %v156, %v160
    %v162 = vlaneseq
    %v163 = vshrl.u32 %v162, 7
    %v164 = vsub.s32 1, %v163
    %v165 = vrot.slane %v156, %v164
    %v168 = vmul.f32 %v153, %v161
    %v169 = vmul.f32 %v154, %v165
    %170 = vrot.lane.b32.xlu0 %v56, 113
    %v171 = vpop.permute.xlu0 %170
    %172 = vrot.lane.b32.xlu0 %v57, 113
    %v173 = vpop.permute.xlu0 %172
    %vm174 = vcmp.lt.s32.totalorder %v64, 113
    %v175 = vsel %vm174, %v171, %v173
    %v176 = vsel %vm174, %v173, %v171
    %s177 = scalar_lea.vmem [#allocation7], 5
    %v178 = vld [vmem:[%s177] ss:$8 sm:$0x3]
    %v180 = vlaneseq
    %v181 = vshrl.u32 %v180, 7
    %v182 = vsub.s32 0, %v181
    %v183 = vrot.slane %v178, %v182
    %v184 = vlaneseq
    %v185 = vshrl.u32 %v184, 7
    %v186 = vsub.s32 1, %v185
    %v187 = vrot.slane %v178, %v186
    %v190 = vmul.f32 %v175, %v183
    %v191 = vmul.f32 %v176, %v187
    %192 = vrot.lane.b32.xlu0 %v56, 112
    %v193 = vpop.permute.xlu0 %192
    %194 = vrot.lane.b32.xlu0 %v57, 112
    %v195 = vpop.permute.xlu0 %194
    %vm196 = vcmp.lt.s32.totalorder %v64, 112
    %v197 = vsel %vm196, %v193, %v195
    %v198 = vsel %vm196, %v195, %v193
    %s199 = scalar_lea.vmem [#allocation7], 6
    %v200 = vld [vmem:[%s199] ss:$8 sm:$0x3]
    %v202 = vlaneseq
    %v203 = vshrl.u32 %v202, 7
    %v204 = vsub.s32 0, %v203
    %v205 = vrot.slane %v200, %v204
    %v206 = vlaneseq
    %v207 = vshrl.u32 %v206, 7
    %v208 = vsub.s32 1, %v207
    %v209 = vrot.slane %v200, %v208
    %v212 = vmul.f32 %v197, %v205
    %v213 = vmul.f32 %v198, %v209
    %214 = vrot.lane.b32.xlu0 %v56, 111
    %v215 = vpop.permute.xlu0 %214
    %216 = vrot.lane.b32.xlu0 %v57, 111
    %v217 = vpop.permute.xlu0 %216
    %vm218 = vcmp.lt.s32.totalorder %v64, 111
    %v219 = vsel %vm218, %v215, %v217
    %v220 = vsel %vm218, %v217, %v215
    %s221 = scalar_lea.vmem [#allocation7], 7
    %v222 = vld [vmem:[%s221] ss:$8 sm:$0x3]
    %v224 = vlaneseq
    %v225 = vshrl.u32 %v224, 7
    %v226 = vsub.s32 0, %v225
    %v227 = vrot.slane %v222, %v226
    %v228 = vlaneseq
    %v229 = vshrl.u32 %v228, 7
    %v230 = vsub.s32 1, %v229
    %v231 = vrot.slane %v222, %v230
    %v234 = vmul.f32 %v219, %v227
    %v235 = vmul.f32 %v220, %v231
    %v236 = vld [vmem:[%s3] sm:$0xff]
    %238 = vset.pattern.permute.xlu0 0
    %239 = vperm.xlu0 %238, %v236
    %v240 = vpop.permute.xlu0 %239
    %vm242 = vcmask 588800
    %v244 = vsel %vm242, %v58, 0
    %246 = vmatprep.subr.mxu0 0.0
    %247 = vmatpush1.msra.mxu0 0.0
    %248 = vmatprep.subr.mxu0 0.0
    %249 = vmatpush1.msra.mxu0 0.0
    %250 = vmatprep.subr.mxu0 0.0
    %251 = vmatpush1.msra.mxu0 0.0
    %252 = vmatprep.subr.mxu0 0.0
    %253 = vmatpush1.msra.mxu0 0.0
    %254 = vmatprep.subr.mxu0 0.0
    %255 = vmatpush1.msra.mxu0 0.0
    %256 = vmatprep.subr.mxu0 0.0
    %257 = vmatpush1.msra.mxu0 0.0
    %258 = vmatprep.subr.mxu0 0.0
    %259 = vmatpush1.msra.mxu0 0.0
    %260 = vmatprep.subr.mxu0 %v235
    %261 = vmatpush1.msra.mxu0 %v234
    %262 = vmatprep.subr.mxu0 %v213
    %263 = vmatpush1.msra.mxu0 %v212
    %264 = vmatprep.subr.mxu0 %v191
    %265 = vmatpush1.msra.mxu0 %v190
    %266 = vmatprep.subr.mxu0 %v169
    %267 = vmatpush1.msra.mxu0 %v168
    %268 = vmatprep.subr.mxu0 %v57
    %269 = vmatpush1.msra.mxu0 %v56
    %270 = vmatprep.subr.mxu0 %v147
    %271 = vmatpush1.msra.mxu0 %v146
    %272 = vmatprep.subr.mxu0 %v125
    %273 = vmatpush1.msra.mxu0 %v124
    %274 = vmatprep.subr.mxu0 %v103
    %275 = vmatpush1.msra.mxu0 %v102
    %276 = vmatprep.subr.mxu0 %v81
    %277 = vmatpush1.msra.mxu0 %v80
    %278 = vmatprep.subr.mxu0 0.0
    %279 = vmatpush2.msra.mxu0 0.0
    %280 = vmatprep.subr.mxu0 0.0
    %281 = vmatpush2.msra.mxu0 0.0
    %282 = vmatprep.subr.mxu0 0.0
    %283 = vmatpush2.msra.mxu0 0.0
    %284 = vmatprep.subr.mxu0 0.0
    %285 = vmatpush2.msra.mxu0 0.0
    %286 = vmatprep.subr.mxu0 0.0
    %287 = vmatpush2.msra.mxu0 0.0
    %288 = vmatprep.subr.mxu0 0.0
    %289 = vmatpush2.msra.mxu0 0.0
    %290 = vmatprep.subr.mxu0 0.0
    %291 = vmatpush2.msra.mxu0 0.0
    %292 = vmatprep.subr.mxu0 0.0
    %293 = vmatpush2.msra.mxu0 0.0
    %294 = vmatprep.subr.mxu0 0.0
    %295 = vmatpush2.msra.mxu0 0.0
    %296 = vmatprep.subr.mxu0 0.0
    %297 = vmatpush2.msra.mxu0 0.0
    %298 = vmatprep.subr.mxu0 0.0
    %299 = vmatpush2.msra.mxu0 0.0
    %300 = vmatprep.subr.mxu0 0.0
    %301 = vmatpush2.msra.mxu0 0.0
    %302 = vmatprep.subr.mxu0 0.0
    %303 = vmatpush2.msra.mxu0 0.0
    %304 = vmatprep.subr.mxu0 0.0
    %305 = vmatpush2.msra.mxu0 0.0
    %306 = vmatprep.subr.mxu0 0.0
    %307 = vmatpush2.msra.mxu0 0.0
    %308 = vmatprep.subr.mxu0 0.0
    %309 = vmatpush2.msra.mxu0 0.0
    %310 = vmatprep.mubr.f32.mxu0 0.0
    %311 = vmatmul.mubr.f32.gmra.mxu0 %v244
    %v312 = vpop.f32.mrf.mxu0
    %v313 = vadd.f32 %v240, %v312
    %v314 = vpop.f32.mrf.mxu0
    %v315 = vadd.f32 %v240, %v314
    %316 = vdwg.mxu0
    %v317 = vmax.f32 %v313, 0.0
    %v318 = vmax.f32 %v315, 0.0
    %v319 = vld [vmem:[#allocation5] sm:$0xff]
    %320 = vrot.lane.b32.xlu0 %v317, 17
    %v321 = vpop.permute.xlu0 %320
    %322 = vrot.lane.b32.xlu0 %v318, 17
    %v323 = vpop.permute.xlu0 %322
    %v324 = vsel %vm65, %v321, %v323
    %v325 = vsel %vm65, %v323, %v321
    %v326 = vmul.f32 %v325, %v73
    %v327 = vmul.f32 %v324, %v77
    %328 = vrot.lane.b32.xlu0 %v317, 16
    %v329 = vpop.permute.xlu0 %328
    %330 = vrot.lane.b32.xlu0 %v318, 16
    %v331 = vpop.permute.xlu0 %330
    %v332 = vsel %vm86, %v329, %v331
    %v333 = vsel %vm86, %v331, %v329
    %v334 = vmul.f32 %v333, %v95
    %v335 = vmul.f32 %v332, %v99
    %336 = vrot.lane.b32.xlu0 %v317, 15
    %v337 = vpop.permute.xlu0 %336
    %338 = vrot.lane.b32.xlu0 %v318, 15
    %v339 = vpop.permute.xlu0 %338
    %v340 = vsel %vm108, %v337, %v339
    %v341 = vsel %vm108, %v339, %v337
    %v342 = vmul.f32 %v341, %v117
    %v343 = vmul.f32 %v340, %v121
    %344 = vrot.lane.b32.xlu0 %v317, 1
    %v345 = vpop.permute.xlu0 %344
    %346 = vrot.lane.b32.xlu0 %v318, 1
    %v347 = vpop.permute.xlu0 %346
    %v348 = vsel %vm130, %v345, %v347
    %v349 = vsel %vm130, %v347, %v345
    %v350 = vmul.f32 %v349, %v139
    %v351 = vmul.f32 %v348, %v143
    %352 = vrot.lane.b32.xlu0 %v317, 127
    %v353 = vpop.permute.xlu0 %352
    %354 = vrot.lane.b32.xlu0 %v318, 127
    %v355 = vpop.permute.xlu0 %354
    %v356 = vsel %vm152, %v353, %v355
    %v357 = vsel %vm152, %v355, %v353
    %v358 = vmul.f32 %v356, %v161
    %v359 = vmul.f32 %v357, %v165
    %360 = vrot.lane.b32.xlu0 %v317, 113
    %v361 = vpop.permute.xlu0 %360
    %362 = vrot.lane.b32.xlu0 %v318, 113
    %v363 = vpop.permute.xlu0 %362
    %v364 = vsel %vm174, %v361, %v363
    %v365 = vsel %vm174, %v363, %v361
    %v366 = vmul.f32 %v364, %v183
    %v367 = vmul.f32 %v365, %v187
    %368 = vrot.lane.b32.xlu0 %v317, 112
    %v369 = vpop.permute.xlu0 %368
    %370 = vrot.lane.b32.xlu0 %v318, 112
    %v371 = vpop.permute.xlu0 %370
    %v372 = vsel %vm196, %v369, %v371
    %v373 = vsel %vm196, %v371, %v369
    %v374 = vmul.f32 %v372, %v205
    %v375 = vmul.f32 %v373, %v209
    %376 = vrot.lane.b32.xlu0 %v317, 111
    %v377 = vpop.permute.xlu0 %376
    %378 = vrot.lane.b32.xlu0 %v318, 111
    %v379 = vpop.permute.xlu0 %378
    %v380 = vsel %vm218, %v377, %v379
    %v381 = vsel %vm218, %v379, %v377
    %v382 = vmul.f32 %v380, %v227
    %v383 = vmul.f32 %v381, %v231
    %s384 = scalar_lea.vmem %s3, 8
    %v385 = vld [vmem:[%s384] sm:$0xff]
    %387 = vset.pattern.permute.xlu0 0
    %388 = vperm.xlu0 %387, %v385
    %v389 = vpop.permute.xlu0 %388
    %v392 = vsel %vm242, %v319, 0
    %394 = vmatprep.subr.mxu0 0.0
    %395 = vmatpush1.msra.mxu0 0.0
    %396 = vmatprep.subr.mxu0 0.0
    %397 = vmatpush1.msra.mxu0 0.0
    %398 = vmatprep.subr.mxu0 0.0
    %399 = vmatpush1.msra.mxu0 0.0
    %400 = vmatprep.subr.mxu0 0.0
    %401 = vmatpush1.msra.mxu0 0.0
    %402 = vmatprep.subr.mxu0 0.0
    %403 = vmatpush1.msra.mxu0 0.0
    %404 = vmatprep.subr.mxu0 0.0
    %405 = vmatpush1.msra.mxu0 0.0
    %406 = vmatprep.subr.mxu0 0.0
    %407 = vmatpush1.msra.mxu0 0.0
    %408 = vmatprep.subr.mxu0 %v383
    %409 = vmatpush1.msra.mxu0 %v382
    %410 = vmatprep.subr.mxu0 %v375
    %411 = vmatpush1.msra.mxu0 %v374
    %412 = vmatprep.subr.mxu0 %v367
    %413 = vmatpush1.msra.mxu0 %v366
    %414 = vmatprep.subr.mxu0 %v359
    %415 = vmatpush1.msra.mxu0 %v358
    %416 = vmatprep.subr.mxu0 %v318
    %417 = vmatpush1.msra.mxu0 %v317
    %418 = vmatprep.subr.mxu0 %v351
    %419 = vmatpush1.msra.mxu0 %v350
    %420 = vmatprep.subr.mxu0 %v343
    %421 = vmatpush1.msra.mxu0 %v342
    %422 = vmatprep.subr.mxu0 %v335
    %423 = vmatpush1.msra.mxu0 %v334
    %424 = vmatprep.subr.mxu0 %v327
    %425 = vmatpush1.msra.mxu0 %v326
    %426 = vmatprep.subr.mxu0 0.0
    %427 = vmatpush2.msra.mxu0 0.0
    %428 = vmatprep.subr.mxu0 0.0
    %429 = vmatpush2.msra.mxu0 0.0
    %430 = vmatprep.subr.mxu0 0.0
    %431 = vmatpush2.msra.mxu0 0.0
    %432 = vmatprep.subr.mxu0 0.0
    %433 = vmatpush2.msra.mxu0 0.0
    %434 = vmatprep.subr.mxu0 0.0
    %435 = vmatpush2.msra.mxu0 0.0
    %436 = vmatprep.subr.mxu0 0.0
    %437 = vmatpush2.msra.mxu0 0.0
    %438 = vmatprep.subr.mxu0 0.0
    %439 = vmatpush2.msra.mxu0 0.0
    %440 = vmatprep.subr.mxu0 0.0
    %441 = vmatpush2.msra.mxu0 0.0
    %442 = vmatprep.subr.mxu0 0.0
    %443 = vmatpush2.msra.mxu0 0.0
    %444 = vmatprep.subr.mxu0 0.0
    %445 = vmatpush2.msra.mxu0 0.0
    %446 = vmatprep.subr.mxu0 0.0
    %447 = vmatpush2.msra.mxu0 0.0
    %448 = vmatprep.subr.mxu0 0.0
    %449 = vmatpush2.msra.mxu0 0.0
    %450 = vmatprep.subr.mxu0 0.0
    %451 = vmatpush2.msra.mxu0 0.0
    %452 = vmatprep.subr.mxu0 0.0
    %453 = vmatpush2.msra.mxu0 0.0
    %454 = vmatprep.subr.mxu0 0.0
    %455 = vmatpush2.msra.mxu0 0.0
    %456 = vmatprep.subr.mxu0 0.0
    %457 = vmatpush2.msra.mxu0 0.0
    %458 = vmatprep.mubr.f32.mxu0 0.0
    %459 = vmatmul.mubr.f32.gmra.mxu0 %v392
    %v460 = vpop.f32.mrf.mxu0
    %v461 = vadd.f32 %v389, %v460
    %v462 = vpop.f32.mrf.mxu0
    %v463 = vadd.f32 %v389, %v462
    %464 = vdwg.mxu0
    %v465 = vadd.f32 %v461, %v56
    %v466 = vadd.f32 %v463, %v57
    %v467 = vmax.f32 %v465, 0.0
    %v468 = vmax.f32 %v466, 0.0
    %469 = vst [vmem:[#allocation8] sm:$0xff] %v467
    %470 = vst [vmem:[#allocation8 + $0x8] sm:$0xff] %v468
    // Predicated region
    $region34: #{tpu_custom_call.1} parent=1 // pred_check
      _
    $region35: #{tpu_custom_call.1} parent=1 // pred_check_branch
      %472 = sbr.rel (0) target = $region37
    $region36: #{tpu_custom_call.1} parent=1 // pred_region
      %s474 = ssub.s32 256, 256
      %475 = vsyncadd [#allocation4], %s474
      %s477 = sshll.u32 [#allocation8], 4
      %s478 = int_to_ptr.vmem [resolvable:$true] %s477
      %480 = dma.vmem_to_hbm [thread:$0]  %s478, 256, %s5, [#allocation4]
    $region37: #{tpu_custom_call.1} parent=1 // pred_fallthru
      _
    // Predicated region
    $region38: #{tpu_custom_call.1} parent=1 // pred_check
      _
    $region39: #{tpu_custom_call.1} parent=1 // pred_check_branch
      %482 = sbr.rel (0) target = $region41
    $region40: #{tpu_custom_call.1} parent=1 // pred_region
      %483 = dma.done [#allocation4], 256
    $region41: #{tpu_custom_call.1} parent=1 // pred_fallthru
      _
    %484 = vsyncpa [#allocation3], 1
    %485 = vsyncpa [#allocation6], 1
    %486 = vsyncpa [#allocation4], 1

</llo_original>
